<compile_context>
chip_gen: v6e
topology: v6e:2x2x1
jax: 0.10.0
libtpu: 0.0.40
codegen_flags: <defaults>
</compile_context>

<pallas_src>
import functools

import jax
import jax.numpy as jnp
from jax import lax
from jax.experimental import pallas as pl
from jax.experimental.pallas import tpu as pltpu

EPS = 1e-5      # nn.BatchNorm2d default eps
P_DROP = 0.05   # IC_layer default dropout probability


def _i32c(v):
    """uint32 constant expressed as a (two's-complement) int32 jnp scalar."""
    v &= 0xFFFFFFFF
    if v >= 1 << 31:
        v -= 1 << 32
    return jnp.int32(v)


# ---------------------------------------------------------------------------
# Kernel 1: per-channel sum / sum-of-squares (single pass over x)
# ---------------------------------------------------------------------------
def _stats_kernel(x_ref, sum_ref, sq_ref):
    # x_ref: (C, hw_tile) f32;  sum_ref / sq_ref: (C, 1) f32 resident accumulators.
    @pl.when(jnp.logical_and(pl.program_id(0) == 0, pl.program_id(1) == 0))
    def _init():
        sum_ref[...] = jnp.zeros_like(sum_ref)
        sq_ref[...] = jnp.zeros_like(sq_ref)

    x = x_ref[...]
    sum_ref[...] += jnp.sum(x, axis=1, keepdims=True)
    sq_ref[...] += jnp.sum(x * x, axis=1, keepdims=True)


# ---------------------------------------------------------------------------
# Kernel 2: fused normalize (folded affine + dropout scale) + dropout mask
# ---------------------------------------------------------------------------
def _apply_kernel(seed_ref, x_ref, a_ref, b_ref, o_ref, *,
                  channels, hw, hw_tile, keep_threshold):
    n = pl.program_id(0)
    t = pl.program_id(1)

    x = x_ref[...]                       # (C, hw_tile)
    y = x * a_ref[...] + b_ref[...]      # single FMA per element (a, b per channel)

    # ---- dropout mask: integer hash of the global element index + seed -----
    c_ids = lax.broadcasted_iota(jnp.int32, x.shape, 0)
    l_ids = lax.broadcasted_iota(jnp.int32, x.shape, 1)
    gid = (n * channels + c_ids) * hw + (t * hw_tile + l_ids)   # wraps mod 2^32

    sh16 = jnp.int32(16)
    sh15 = jnp.int32(15)
    h = gid + seed_ref[0] * _i32c(0x9E3779B9)
    # lowbias32-style finalizer: xor-shift / wrapping multiply, all int32 ops.
    h = h ^ lax.shift_right_logical(h, sh16)
    h = h * _i32c(0x7FEB352D)
    h = h ^ lax.shift_right_logical(h, sh15)
    h = h * _i32c(0x846CA68B)
    h = h ^ lax.shift_right_logical(h, sh16)
    r = lax.shift_right_logical(h, jnp.int32(1))    # uniform in [0, 2^31)
    keep = r >= keep_threshold                      # P(keep) = 1 - p

    o_ref[...] = jnp.where(keep, y, 0.0).astype(o_ref.dtype)


# ---------------------------------------------------------------------------
# Wrapper
# ---------------------------------------------------------------------------
def _pick_hw_tile(hw, channels):
    """Largest multiple of 128 (bounded) that divides hw; else the full hw."""
    max_block_bytes = 1 << 20                 # keeps double-buffered in+out small
    max_lanes = (max_block_bytes // (4 * max(channels, 1))) // 128 * 128
    max_lanes = int(min(max(max_lanes, 128), 2048))
    best = None
    if hw % 128 == 0:
        for cand in range(128, min(hw, max_lanes) + 1, 128):
            if hw % cand == 0:
                best = cand
    return best if best is not None else hw


def _compiler_params(block_bytes, semantics):
    vmem_limit = int(min(64 * 1024 * 1024,
                         max(32 * 1024 * 1024, 6 * block_bytes + (2 << 20))))
    return pltpu.CompilerParams(dimension_semantics=semantics,
                                vmem_limit_bytes=vmem_limit)


def ic_layer_forward(x_nchw, gamma, beta, seed, p_drop=P_DROP, eps=EPS):
    """x_nchw: (N, C, H, W) f32; gamma, beta: (C,) f32; seed: python int."""
    N, C, H, W = x_nchw.shape
    HW = H * W
    L = N * HW

    x3d = x_nchw.reshape(N, C, HW).astype(jnp.float32)   # free reshape, no transpose
    hw_tile = _pick_hw_tile(HW, C)
    num_t = HW // hw_tile
    block_bytes = C * hw_tile * 4

    # ---- pass 1: per-channel sum / sumsq (tiled, pipelined) ----------------
    sums, sqs = pl.pallas_call(
        _stats_kernel,
        grid=(N, num_t),
        in_specs=[pl.BlockSpec((None, C, hw_tile), lambda n, t: (n, 0, t))],
        out_specs=[pl.BlockSpec((C, 1), lambda n, t: (0, 0)),
                   pl.BlockSpec((C, 1), lambda n, t: (0, 0))],
        out_shape=[jax.ShapeDtypeStruct((C, 1), jnp.float32),
                   jax.ShapeDtypeStruct((C, 1), jnp.float32)],
        compiler_params=_compiler_params(block_bytes, ("arbitrary", "arbitrary")),
    )(x3d)

    # ---- tiny (C,)-sized math: fold BN affine + dropout scale --------------
    mean = sums / L
    var = jnp.maximum(sqs / L - mean * mean, 0.0)        # biased variance
    inv_std = lax.rsqrt(var + eps)
    s = gamma.reshape(C, 1).astype(jnp.float32) * inv_std
    keep_scale = 1.0 / (1.0 - p_drop)
    a = s * keep_scale
    b = (beta.reshape(C, 1).astype(jnp.float32) - mean * s) * keep_scale

    seed_arr = jnp.asarray([seed], dtype=jnp.int32)
    keep_threshold = int(round(p_drop * (1 << 31)))

    kernel = functools.partial(_apply_kernel, channels=C, hw=HW,
                               hw_tile=hw_tile, keep_threshold=keep_threshold)

    # ---- pass 2: normalize + dropout (tiled, pipelined, megacore-parallel) -
    out3d = pl.pallas_call(
        kernel,
        grid=(N, num_t),
        in_specs=[
            pl.BlockSpec(memory_space=pltpu.SMEM),                       # seed
            pl.BlockSpec((None, C, hw_tile), lambda n, t: (n, 0, t)),    # x
            pl.BlockSpec((C, 1), lambda n, t: (0, 0)),                   # a
            pl.BlockSpec((C, 1), lambda n, t: (0, 0)),                   # b
        ],
        out_specs=pl.BlockSpec((None, C, hw_tile), lambda n, t: (n, 0, t)),
        out_shape=jax.ShapeDtypeStruct((N, C, HW), jnp.float32),
        compiler_params=_compiler_params(block_bytes, ("parallel", "parallel")),
    )(seed_arr, x3d, a, b)

    return out3d.reshape(N, C, H, W)


if __name__ == "__main__":
    key = jax.random.PRNGKey(0)
    kx, kg, kb = jax.random.split(key, 3)

    N, C, H, W = 2, 4, 16, 16
    x = jax.random.normal(kx, (N, C, H, W), dtype=jnp.float32) * 2.0 + 0.5
    # nn.BatchNorm2d default init is weight=1, bias=0; perturb so the affine
    # path is actually exercised.
    gamma = 1.0 + 0.1 * jax.random.normal(kg, (C,), dtype=jnp.float32)
    beta = 0.1 * jax.random.normal(kb, (C,), dtype=jnp.float32)

    out = ic_layer_forward(x, gamma, beta, seed=1234)
    out = jax.block_until_ready(out)

    # ---- sanity checks against a pure-JAX BatchNorm reference --------------
    mean = x.mean(axis=(0, 2, 3), keepdims=True)
    var = x.var(axis=(0, 2, 3), keepdims=True)            # biased variance
    bn = (x - mean) / jnp.sqrt(var + EPS) * gamma.reshape(1, C, 1, 1) \
        + beta.reshape(1, C, 1, 1)
    kept_ref = bn / (1.0 - P_DROP)

    dropped = (out == 0.0)
    match = jnp.isclose(out, kept_ref, rtol=1e-3, atol=1e-3)
    assert bool(jnp.all(dropped | match)), "kept values disagree with BN reference"
    frac = float(jnp.mean(dropped.astype(jnp.float32)))
    assert 0.005 <= frac <= 0.15, f"drop fraction {frac} far from p={P_DROP}"
    assert out.shape == (N, C, H, W) and out.dtype == jnp.float32

    print("KERNEL_OK")
</pallas_src>

<mosaic_0001>
module attributes {stable_mosaic.version = 11 : i64} {
  func.func @_stats_kernel(%arg0: i32, %arg1: i32, %arg2: memref<1x4x256xf32, #tpu.memory_space<vmem>>, %arg3: memref<4x1xf32, #tpu.memory_space<vmem>>, %arg4: memref<4x1xf32, #tpu.memory_space<vmem>>) attributes {dimension_semantics = [#tpu.dimension_semantics<arbitrary>, #tpu.dimension_semantics<arbitrary>], iteration_bounds = array<i64: 2, 1>, scalar_prefetch = 0 : i64, scratch_operands = 0 : i64, tpu.core_type = #tpu.core_type<tc>, window_params = [{transform_indices = @transform_0, window_bounds = array<i64: 1, 4, 256>}, {pipeline_mode = #tpu.pipeline_mode<synchronous>, transform_indices = @transform_1, window_bounds = array<i64: 4, 1>}, {pipeline_mode = #tpu.pipeline_mode<synchronous>, transform_indices = @transform_2, window_bounds = array<i64: 4, 1>}]} {
    %c0_i32 = arith.constant 0 : i32
    %0 = arith.cmpi eq, %arg0, %c0_i32 : i32
    %c0_i32_0 = arith.constant 0 : i32
    %1 = arith.cmpi eq, %arg1, %c0_i32_0 : i32
    %2 = arith.andi %0, %1 : i1
    %3 = arith.extui %2 : i1 to i32
    %c0_i32_1 = arith.constant 0 : i32
    %4 = arith.cmpi ne, %3, %c0_i32_1 : i32
    scf.if %4 {
      %cst_13 = arith.constant 0.000000e+00 : f32
      %18 = vector.broadcast %cst_13 : f32 to vector<4x1xf32>
      %c0_14 = arith.constant 0 : index
      %c0_15 = arith.constant 0 : index
      %19 = vector.load %arg3[%c0_14, %c0_15] : memref<4x1xf32, #tpu.memory_space<vmem>>, vector<4x1xf32>
      tpu.vector_store %arg3[%c0_14, %c0_15], %18 {strides = array<i32>} : memref<4x1xf32, #tpu.memory_space<vmem>>, vector<4x1xf32>,
      %cst_16 = arith.constant 0.000000e+00 : f32
      %20 = vector.broadcast %cst_16 : f32 to vector<4x1xf32>
      %c0_17 = arith.constant 0 : index
      %c0_18 = arith.constant 0 : index
      %21 = vector.load %arg4[%c0_17, %c0_18] : memref<4x1xf32, #tpu.memory_space<vmem>>, vector<4x1xf32>
      tpu.vector_store %arg4[%c0_17, %c0_18], %20 {strides = array<i32>} : memref<4x1xf32, #tpu.memory_space<vmem>>, vector<4x1xf32>,
    } else {
    }
    %c0 = arith.constant 0 : index
    %c0_2 = arith.constant 0 : index
    %c0_3 = arith.constant 0 : index
    %5 = vector.load %arg2[%c0, %c0_2, %c0_3] : memref<1x4x256xf32, #tpu.memory_space<vmem>>, vector<1x4x256xf32>
    %6 = vector.shape_cast %5 : vector<1x4x256xf32> to vector<4x256xf32>
    %c0_4 = arith.constant 0 : index
    %c0_5 = arith.constant 0 : index
    %7 = vector.load %arg3[%c0_4, %c0_5] : memref<4x1xf32, #tpu.memory_space<vmem>>, vector<4x1xf32>
    %cst = arith.constant dense<0.000000e+00> : vector<4xf32>
    %8 = vector.multi_reduction <add>, %6, %cst [1] : vector<4x256xf32> to vector<4xf32>
    %9 = vector.shape_cast %8 : vector<4xf32> to vector<4x1xf32>
    %10 = arith.addf %7, %9 : vector<4x1xf32>
    %c0_6 = arith.constant 0 : index
    %c0_7 = arith.constant 0 : index
    %11 = vector.load %arg3[%c0_6, %c0_7] : memref<4x1xf32, #tpu.memory_space<vmem>>, vector<4x1xf32>
    tpu.vector_store %arg3[%c0_6, %c0_7], %10 {strides = array<i32>} : memref<4x1xf32, #tpu.memory_space<vmem>>, vector<4x1xf32>,
    %c0_8 = arith.constant 0 : index
    %c0_9 = arith.constant 0 : index
    %12 = vector.load %arg4[%c0_8, %c0_9] : memref<4x1xf32, #tpu.memory_space<vmem>>, vector<4x1xf32>
    %13 = arith.mulf %6, %6 : vector<4x256xf32>
    %cst_10 = arith.constant dense<0.000000e+00> : vector<4xf32>
    %14 = vector.multi_reduction <add>, %13, %cst_10 [1] : vector<4x256xf32> to vector<4xf32>
    %15 = vector.shape_cast %14 : vector<4xf32> to vector<4x1xf32>
    %16 = arith.addf %12, %15 : vector<4x1xf32>
    %c0_11 = arith.constant 0 : index
    %c0_12 = arith.constant 0 : index
    %17 = vector.load %arg4[%c0_11, %c0_12] : memref<4x1xf32, #tpu.memory_space<vmem>>, vector<4x1xf32>
    tpu.vector_store %arg4[%c0_11, %c0_12], %16 {strides = array<i32>} : memref<4x1xf32, #tpu.memory_space<vmem>>, vector<4x1xf32>,
    return
  }
  func.func @transform_0(%arg0: i32, %arg1: i32) -> (i32, i32, i32) {
    %c0_i32 = arith.constant 0 : i32
    %c0_i32_0 = arith.constant 0 : i32
    return %arg0, %c0_i32, %arg1 : i32, i32, i32
  }
  func.func @transform_1(%arg0: i32, %arg1: i32) -> (i32, i32) {
    %c0_i32 = arith.constant 0 : i32
    %c0_i32_0 = arith.constant 0 : i32
    %c0_i32_1 = arith.constant 0 : i32
    return %c0_i32, %c0_i32_0 : i32, i32
  }
  func.func @transform_2(%arg0: i32, %arg1: i32) -> (i32, i32) {
    %c0_i32 = arith.constant 0 : i32
    %c0_i32_0 = arith.constant 0 : i32
    %c0_i32_1 = arith.constant 0 : i32
    return %c0_i32, %c0_i32_0 : i32, i32
  }
}

</mosaic_0001>

<llo_original>
// kernel: tpu_custom_call.1
$region0: #{tpu_custom_call.1}
  #allocation0 [shape = 'u32[]', space=smem, size = 0x4, offset = 0x4, fixed_abs, tag = 'smem constant byte address 0x4 - core index']
  #allocation1 [shape = 'u32[144,128]{1,0:T(1,128)}', space=vmem, size = 0x12000, scoped, tag = 'internal scratch']
  %s0 = inlined_call_operand.hbm [shape: f32[2,4,256], index: 0, kind: input, shape index: {}]
  %s1 = inlined_call_operand.vmem [shape: f32[4,1], index: 1, kind: output, shape index: {0}]
  %s2 = inlined_call_operand.vmem [shape: f32[4,1], index: 2, kind: output, shape index: {1}]
  %3 = xla_tuple %s1, %s2
  %s4 = sld [smem:[#allocation0]]
  $region53: #{tpu_custom_call.1} parent=0
    _
  %s6 = ssub.s32 1, %s4
  %s7 = scalar_select 0, %s6, %s4
  $region1: #{tpu_custom_call.1} parent=0
    #allocation2 [shape = 'u8[8192]{0}', space=vmem, size = 0x2000, scoped, tag = 'input window, operand 0']
    #allocation3 [shape = 's32[2]{0}', space=sflag, size = 0x8, scoped, tag = 'scoped memory for tpu_custom_call.1']
    %8 = vsyncpa [#allocation3], 0
    %s9 = scalar_lea.sflag [#allocation3], 1
    %10 = vsyncpa %s9, 0
    loop: start=0, step=1, limit=4
    $region2: #{tpu_custom_call.1} parent=1 // loop_pre_header
      _
    $region3: #{tpu_custom_call.1} parent=1 // loop_header
      %s12 = sphi 0, %s16
      %p13 = scmp.ge.s32.totalorder %s12, 4
      %s19 = sphi 0, %s31
      %s20 = sphi 0, %s27
      %s21 = sphi 0, %s19
      %s22 = sphi 0, %s20
      %s23 = sphi 0, %s21
      %s24 = sphi 0, %s22
      %s36 = sphi 0, %s38
      %s39 = sphi 0, %s36
      %s40 = sphi 0, %s39
      %s56 = sphi 0, %s40
      %s60 = sphi 0, %s60
      %s62 = sphi 0, %s60
      %s63 = sphi 0, %s62
      %s77 = sphi 0, %s63
      %s81 = sphi 0, %s81
      %s83 = sphi 0, %s81
      %s84 = sphi 0, %s83
      %s98 = sphi 0, %s84
    $region4: #{tpu_custom_call.1} parent=1 // loop_header_branch
      %15 = sbr.rel (%p13) target = $region8
    $region5: #{tpu_custom_call.1} parent=1 // loop_body
      %s17 = ssub.s32 %s12, 1
      %s18 = ssub.s32 %s12, 2
      %s25 = sadd.s32 1, %s20
      %p26 = scmp.ge.s32.totalorder %s25, 1
      %s27 = scalar_select %p26, 0, %s25
      %s28 = sadd.s32 1, %s19
      %s29 = scalar_select %p26, %s28, %s19
      %p30 = scmp.ge.s32.totalorder %s29, 2
      %s31 = scalar_select %p30, 0, %s29
      %s32 = ssub.s32 %s19, %s31
      %s33 = ssub.s32 %s20, %s27
      %s34 = sor.u32 %s32, %s33
      %p35 = scmp.eq.s32.totalorder %s34, 0
      %s37 = sadd.s32 %s36, 1
      %s38 = scalar_select %p35, %s36, %s37
      %p41 = pneg %p35
      %p42 = scmp.eq.s32.totalorder %s12, 1
      %p43 = por %p41, %p42
      %p44 = scmp.ne.s32.totalorder %s36, %s39
      %p45 = scmp.eq.s32.totalorder %s12, 0
      %p46 = por %p44, %p45
      %p47 = scmp.ne.s32.totalorder %s36, %s39
      %p48 = scmp.eq.s32.totalorder %s17, 1
      %p49 = por %p47, %p48
      %p50 = scmp.ne.s32.totalorder %s39, %s40
      %p51 = scmp.eq.s32.totalorder %s17, 0
      %p52 = por %p50, %p51
      %p53 = scmp.ne.s32.totalorder %s39, %s40
      %p54 = scmp.eq.s32.totalorder %s18, 1
      %p55 = por %p53, %p54
      %p57 = scmp.ne.s32.totalorder %s40, %s56
      %p58 = scmp.eq.s32.totalorder %s18, 0
      %p59 = por %p57, %p58
      %s61 = sadd.s32 %s60, 1
      %p64 = scmp.eq.s32.totalorder %s12, 1
      %p65 = scmp.ne.s32.totalorder %s60, %s62
      %p66 = scmp.eq.s32.totalorder %s12, 0
      %p67 = por %p65, %p66
      %p68 = scmp.ne.s32.totalorder %s60, %s62
      %p69 = scmp.eq.s32.totalorder %s17, 1
      %p70 = por %p68, %p69
      %p71 = scmp.ne.s32.totalorder %s62, %s63
      %p72 = scmp.eq.s32.totalorder %s17, 0
      %p73 = por %p71, %p72
      %p74 = scmp.ne.s32.totalorder %s62, %s63
      %p75 = scmp.eq.s32.totalorder %s18, 1
      %p76 = por %p74, %p75
      %p78 = scmp.ne.s32.totalorder %s63, %s77
      %p79 = scmp.eq.s32.totalorder %s18, 0
      %p80 = por %p78, %p79
      %s82 = sadd.s32 %s81, 1
      %p85 = scmp.eq.s32.totalorder %s12, 1
      %p86 = scmp.ne.s32.totalorder %s81, %s83
      %p87 = scmp.eq.s32.totalorder %s12, 0
      %p88 = por %p86, %p87
      %p89 = scmp.ne.s32.totalorder %s81, %s83
      %p90 = scmp.eq.s32.totalorder %s17, 1
      %p91 = por %p89, %p90
      %p92 = scmp.ne.s32.totalorder %s83, %s84
      %p93 = scmp.eq.s32.totalorder %s17, 0
      %p94 = por %p92, %p93
      %p95 = scmp.ne.s32.totalorder %s83, %s84
      %p96 = scmp.eq.s32.totalorder %s18, 1
      %p97 = por %p95, %p96
      %p99 = scmp.ne.s32.totalorder %s84, %s98
      %p100 = scmp.eq.s32.totalorder %s18, 0
      %p101 = por %p99, %p100
      %p102 = scmp.le.s32.totalorder 1, %s12
      %p103 = scmp.lt.s32.totalorder %s12, 3
      %p104 = pnand %p102, %p103
      %p105 = pneg %p104
      // Predicated region
      $region9: #{tpu_custom_call.1} parent=5 // pred_check
        _
      $region10: #{tpu_custom_call.1} parent=5 // pred_check_branch
        %107 = sbr.rel (%p104) target = $region12
      $region11: #{tpu_custom_call.1} parent=5 // pred_region
        %s108 = ssub.s32 %s12, 1
      $region12: #{tpu_custom_call.1} parent=5 // pred_fallthru
        _
      %p109 = scmp.lt.s32.totalorder %s12, 2
      // Predicated region
      $region13: #{tpu_custom_call.1} parent=5 // pred_check
        %p110 = pneg %p109
      $region14: #{tpu_custom_call.1} parent=5 // pred_check_branch
        %112 = sbr.rel (%p110) target = $region16
      $region15: #{tpu_custom_call.1} parent=5 // pred_region
        // Predicated region
        $region17: #{tpu_custom_call.1} parent=15 // pred_check
          %p113 = pneg %p46
        $region18: #{tpu_custom_call.1} parent=15 // pred_check_branch
          %115 = sbr.rel (%p113) target = $region20
        $region19: #{tpu_custom_call.1} parent=15 // pred_region
          %s116 = sand.u32 %s36, 1
          %s117 = scalar_lea.sflag [#allocation3], %s116
          %s118 = sand.u32 %s36, 1
          %s119 = smul.addr %s118, 8
          %s120 = scalar_lea.vmem [#allocation2], %s119
          %s121 = smul.u32 2, %s20
          %s123 = ssub.s32 128, 128
          %124 = vsyncadd %s117, %s123
          %s125 = smul.addr %s19, 2
          %s126 = sadd.s32 %s121, %s125
          %s127 = smul.addr %s126, 64
          %s128 = scalar_lea.hbm %s0, %s127
          %s130 = sshll.u32 %s120, 4
          %s131 = int_to_ptr.vmem [resolvable:$true] %s130
          %133 = dma.hbm_to_vmem [thread:$0]  %s128, 128, %s131, %s117
        $region20: #{tpu_custom_call.1} parent=15 // pred_fallthru
          _
      $region16: #{tpu_custom_call.1} parent=5 // pred_fallthru
        _
      %p134 = scmp.le.s32.totalorder 1, %s12
      %p135 = scmp.lt.s32.totalorder %s12, 3
      %p136 = pnand %p134, %p135
      %p137 = pneg %p136
      // Predicated region
      $region21: #{tpu_custom_call.1} parent=5 // pred_check
        _
      $region22: #{tpu_custom_call.1} parent=5 // pred_check_branch
        %139 = sbr.rel (%p136) target = $region24
      $region23: #{tpu_custom_call.1} parent=5 // pred_region
        %s140 = ssub.s32 %s12, 1
        %s141 = sand.u32 %s39, 1
        %s142 = scalar_lea.sflag [#allocation3], %s141
        %s143 = sand.u32 %s39, 1
        %s144 = smul.addr %s143, 8
        %s145 = scalar_lea.vmem [#allocation2], %s144
        // Predicated region
        $region25: #{tpu_custom_call.1} parent=23 // pred_check
          %p146 = pneg %p52
        $region26: #{tpu_custom_call.1} parent=23 // pred_check_branch
          %148 = sbr.rel (%p146) target = $region28
        $region27: #{tpu_custom_call.1} parent=23 // pred_region
          %149 = dma.done %s142, 128
        $region28: #{tpu_custom_call.1} parent=23 // pred_fallthru
          _
        %s150 = sand.u32 %s39, 1
        %s151 = scalar_lea.sflag [#allocation3], %s150
        %s152 = sand.u32 %s39, 1
        %s153 = smul.addr %s152, 8
        %s154 = scalar_lea.vmem [#allocation2], %s153
        %p155 = pneg %p52
        %p156 = pneg %p49
        %p157 = pneg %p73
        %p158 = pneg %p70
        %p159 = pneg %p94
        %p160 = pneg %p91
        %s161 = smul.u32 2, %s22
        %p162 = scmp.eq.s32.totalorder %s21, 0
        %p163 = scmp.eq.s32.totalorder %s22, 0
        %p164 = pnand %p162, %p163
        %p165 = pneg %p164
        // Predicated region
        $region29: #{tpu_custom_call.1} parent=23 // pred_check
          _
        $region30: #{tpu_custom_call.1} parent=23 // pred_check_branch
          %167 = sbr.rel (%p164) target = $region32
        $region31: #{tpu_custom_call.1} parent=23 // pred_region
          %vm168 = vcmask 3072
          %169 = vst.msk [vmem:[%s1] sm:$0xf] %vm168, 0.0
          %170 = vst.msk [vmem:[%s2] sm:$0xf] %vm168, 0.0
        $region32: #{tpu_custom_call.1} parent=23 // pred_fallthru
          _
        %v171 = vld [vmem:[%s145] sm:$0xff]
        %v172 = vld [vmem:[%s1] sm:$0xf]
        %v174 = vcombine.high %v171, %v171
        %vm176 = vcmask 1043456
        %v177 = vsel %vm176, %v171, 0.0
        %v178 = vsel %vm176, %v174, 0.0
        %v179 = vadd.f32 %v177, %v178
        %180 = vadd.xlane.f32.xlu0 %v179
        %v181 = vpop.xlane.xlu0 %180
        %v182 = vadd.f32 %v172, %v181
        %vm183 = vcmask 3072
        %184 = vst.msk [vmem:[%s1] sm:$0xf] %vm183, %v182
        %v185 = vld [vmem:[%s2] sm:$0xf]
        %v186 = vmul.f32 %v171, %v171
        %v188 = vcombine.high %v186, %v186
        %v190 = vsel %vm176, %v186, 0.0
        %v191 = vsel %vm176, %v188, 0.0
        %v192 = vadd.f32 %v190, %v191
        %193 = vadd.xlane.f32.xlu0 %v192
        %v194 = vpop.xlane.xlu0 %193
        %v195 = vadd.f32 %v185, %v194
        %196 = vst.msk [vmem:[%s2] sm:$0xf] %vm183, %v195
        // Predicated region
        $region33: #{tpu_custom_call.1} parent=23 // pred_check
          %p197 = pneg %p70
        $region34: #{tpu_custom_call.1} parent=23 // pred_check_branch
          %199 = sbr.rel (%p197) target = $region36
        $region35: #{tpu_custom_call.1} parent=23 // pred_region
          _
        $region36: #{tpu_custom_call.1} parent=23 // pred_fallthru
          _
        // Predicated region
        $region37: #{tpu_custom_call.1} parent=23 // pred_check
          %p200 = pneg %p91
        $region38: #{tpu_custom_call.1} parent=23 // pred_check_branch
          %202 = sbr.rel (%p200) target = $region40
        $region39: #{tpu_custom_call.1} parent=23 // pred_region
          _
        $region40: #{tpu_custom_call.1} parent=23 // pred_fallthru
          _
        // Predicated region
        $region41: #{tpu_custom_call.1} parent=23 // pred_check
          %p203 = pneg %p70
        $region42: #{tpu_custom_call.1} parent=23 // pred_check_branch
          %205 = sbr.rel (%p203) target = $region44
        $region43: #{tpu_custom_call.1} parent=23 // pred_region
          _
        $region44: #{tpu_custom_call.1} parent=23 // pred_fallthru
          _
        // Predicated region
        $region45: #{tpu_custom_call.1} parent=23 // pred_check
          %p206 = pneg %p91
        $region46: #{tpu_custom_call.1} parent=23 // pred_check_branch
          %208 = sbr.rel (%p206) target = $region48
        $region47: #{tpu_custom_call.1} parent=23 // pred_region
          _
        $region48: #{tpu_custom_call.1} parent=23 // pred_fallthru
          _
      $region24: #{tpu_custom_call.1} parent=5 // pred_fallthru
        _
      %p209 = scmp.le.s32.totalorder 2, %s12
      // Predicated region
      $region49: #{tpu_custom_call.1} parent=5 // pred_check
        %p210 = pneg %p209
      $region50: #{tpu_custom_call.1} parent=5 // pred_check_branch
        %212 = sbr.rel (%p210) target = $region52
      $region51: #{tpu_custom_call.1} parent=5 // pred_region
        %s213 = ssub.s32 %s12, 2
      $region52: #{tpu_custom_call.1} parent=5 // pred_fallthru
        _
    $region6: #{tpu_custom_call.1} parent=1 // loop_footer
      %s16 = sadd.s32 1, %s12
    $region7: #{tpu_custom_call.1} parent=1 // loop_footer_branch
      %11 = sbr.rel target = $region3
    $region8: #{tpu_custom_call.1} parent=1 // loop_exit
      _
    %214 = vsyncpa [#allocation3], 1
    %s215 = scalar_lea.sflag [#allocation3], 1
    %216 = vsyncpa %s215, 1

</llo_original>
